<compile_context>
chip_gen: v5e
topology: v5e:2x2
jax: 0.10.0
libtpu: 0.0.40
codegen_flags: <defaults>
</compile_context>

<pallas_src>
import jax
import jax.numpy as jnp
from jax.experimental import pallas as pl
from jax.experimental.pallas import tpu as pltpu


def _mlp_kernel_single_k(x_ref, w_ref, x_out_ref, y_out_ref):
    """Single K block: x_ref [tm, K], w_ref [K, tn] — direct store, no acc."""
    out = jnp.dot(
        x_ref[...], w_ref[...], preferred_element_type=jnp.float32
    ).astype(x_out_ref.dtype)
    # First output: x = x @ W^T.
    x_out_ref[...] = out
    # Second output: y = cat([x, x], dim=0), staged as [2, M, N] so each copy
    # is a single contiguous full-tile store.
    y_out_ref[0] = out
    y_out_ref[1] = out


def _mlp_kernel_tiled_k(x_ref, w_ref, x_out_ref, y_out_ref, acc_ref):
    """Tiled K: x_ref [tm, tk], w_ref [tk, tn], f32 acc, K innermost."""
    k = pl.program_id(2)

    @pl.when(k == 0)
    def _():
        acc_ref[...] = jnp.zeros_like(acc_ref)

    acc_ref[...] += jnp.dot(
        x_ref[...], w_ref[...], preferred_element_type=jnp.float32
    )

    @pl.when(k == pl.num_programs(2) - 1)
    def _():
        out = acc_ref[...].astype(x_out_ref.dtype)
        x_out_ref[...] = out
        y_out_ref[0] = out
        y_out_ref[1] = out


def multi_output_arg_mlp(
    x,
    w_t,
    *,
    tm_pref=512,
    tn_pref=512,
    tk_pref=1024,
    vmem_limit_bytes=48 * 1024 * 1024,
):
    """x: [B, dim]; w_t: [dim, out_dim] (nn.Linear weight transposed ONCE at init).

    Returns (x_out [B, out_dim], y_out [2B, out_dim]).
    """
    m, k = x.shape
    k2, n = w_t.shape
    assert k == k2, "weight inner dim must match x feature dim"

    # Full-extent block when the dim is smaller than the preferred tile
    # (always legal); otherwise a fixed aligned tile with a cdiv grid
    # (ragged trailing M/N blocks are dropped on writeback — safe).
    tm = m if m <= tm_pref else tm_pref
    tn = n if n <= tn_pref else tn_pref
    grid_m = pl.cdiv(m, tm)
    grid_n = pl.cdiv(n, tn)

    itemsize = jnp.dtype(x.dtype).itemsize
    cost = pl.CostEstimate(
        flops=2 * m * k * n,
        transcendentals=0,
        # x is re-streamed grid_n times, w grid_m times; x_out + 2*y_out writes.
        bytes_accessed=(grid_n * m * k + grid_m * n * k + 3 * m * n) * itemsize,
    )

    x_out_shape = jax.ShapeDtypeStruct((m, n), x.dtype)
    # y is produced as [2, M, N]; reshaped to [2M, N] (free, row-major) below.
    y_out_shape = jax.ShapeDtypeStruct((2, m, n), x.dtype)

    if k <= tk_pref:
        # ---- Common MLP case: whole K fits in one block. No reduction axis,
        # no accumulator scratch, no init/finalize phases.
        tk = k
        x_out, y_out = pl.pallas_call(
            _mlp_kernel_single_k,
            out_shape=(x_out_shape, y_out_shape),
            grid_spec=pltpu.PrefetchScalarGridSpec(
                num_scalar_prefetch=0,
                grid=(grid_m, grid_n),
                in_specs=[
                    pl.BlockSpec((tm, tk), lambda i, j: (i, 0)),   # x tile [tm, K]
                    pl.BlockSpec((tk, tn), lambda i, j: (0, j)),   # w tile [K, tn]
                ],
                out_specs=[
                    pl.BlockSpec((tm, tn), lambda i, j: (i, j)),
                    pl.BlockSpec((2, tm, tn), lambda i, j: (0, i, j)),
                ],
            ),
            compiler_params=pltpu.CompilerParams(
                dimension_semantics=("parallel", "parallel"),
                vmem_limit_bytes=vmem_limit_bytes,
            ),
            cost_estimate=cost,
        )(x, w_t)
    else:
        # ---- Large K: tile the reduction. Zero-pad K so ragged reduction
        # blocks never accumulate garbage.
        tk = tk_pref
        if k % tk != 0:
            k_pad = pl.cdiv(k, tk) * tk
            x = jnp.pad(x, ((0, 0), (0, k_pad - k)))
            w_t = jnp.pad(w_t, ((0, k_pad - k), (0, 0)))
            k = k_pad
        x_out, y_out = pl.pallas_call(
            _mlp_kernel_tiled_k,
            out_shape=(x_out_shape, y_out_shape),
            grid_spec=pltpu.PrefetchScalarGridSpec(
                num_scalar_prefetch=0,
                grid=(grid_m, grid_n, k // tk),
                in_specs=[
                    pl.BlockSpec((tm, tk), lambda i, j, kk: (i, kk)),  # x tile
                    pl.BlockSpec((tk, tn), lambda i, j, kk: (kk, j)),  # w tile [K,N]
                ],
                out_specs=[
                    pl.BlockSpec((tm, tn), lambda i, j, kk: (i, j)),
                    pl.BlockSpec((2, tm, tn), lambda i, j, kk: (0, i, j)),
                ],
                scratch_shapes=[pltpu.VMEM((tm, tn), jnp.float32)],
            ),
            compiler_params=pltpu.CompilerParams(
                dimension_semantics=("parallel", "parallel", "arbitrary"),
                vmem_limit_bytes=vmem_limit_bytes,
            ),
            cost_estimate=cost,
        )(x, w_t)

    return x_out, y_out.reshape(2 * m, n)


if __name__ == "__main__":
    # Small shapes consistent with the module: Linear(dim=32, out_dim=16), batch=8.
    B, DIM, OUT_DIM = 8, 32, 16

    key = jax.random.PRNGKey(0)
    kx, kw = jax.random.split(key)

    x = jax.random.normal(kx, (B, DIM), dtype=jnp.float32)
    # Deterministic init mirroring nn.Linear default: U(-1/sqrt(dim), 1/sqrt(dim)),
    # stored in PyTorch layout [out_dim, dim].
    bound = 1.0 / (DIM ** 0.5)
    w = jax.random.uniform(
        kw, (OUT_DIM, DIM), dtype=jnp.float32, minval=-bound, maxval=bound
    )

    # One-time, init-style transpose to [dim, out_dim] so every kernel call
    # sees the weight in MXU-native [K, N] orientation (amortized across calls).
    w_t = jnp.asarray(w.T)

    x_out, y_out = multi_output_arg_mlp(x, w_t)
    jax.block_until_ready((x_out, y_out))

    # Reference check (plain JAX).
    x_ref = x @ w.T
    y_ref = jnp.concatenate([x_ref, x_ref], axis=0)
    assert x_out.shape == (B, OUT_DIM)
    assert y_out.shape == (2 * B, OUT_DIM)
    assert jnp.allclose(x_out, x_ref, atol=1e-5, rtol=1e-5)
    assert jnp.allclose(y_out, y_ref, atol=1e-5, rtol=1e-5)

    print("KERNEL_OK")
</pallas_src>

<mosaic_0001>
module attributes {stable_mosaic.version = 11 : i64} {
  func.func @_mlp_kernel_single_k(%arg0: i32, %arg1: i32, %arg2: memref<8x32xf32, #tpu.memory_space<vmem>>, %arg3: memref<32x16xf32, #tpu.memory_space<vmem>>, %arg4: memref<8x16xf32, #tpu.memory_space<vmem>>, %arg5: memref<2x8x16xf32, #tpu.memory_space<vmem>>) attributes {dimension_semantics = [#tpu.dimension_semantics<parallel>, #tpu.dimension_semantics<parallel>], iteration_bounds = array<i64: 1, 1>, scalar_prefetch = 0 : i64, scratch_operands = 0 : i64, tpu.core_type = #tpu.core_type<tc>, window_params = [{transform_indices = @transform_0, window_bounds = array<i64: 8, 32>}, {transform_indices = @transform_1, window_bounds = array<i64: 32, 16>}, {transform_indices = @transform_2, window_bounds = array<i64: 8, 16>}, {transform_indices = @transform_3, window_bounds = array<i64: 2, 8, 16>}]} {
    %c0 = arith.constant 0 : index
    %c0_0 = arith.constant 0 : index
    %0 = vector.load %arg2[%c0, %c0_0] : memref<8x32xf32, #tpu.memory_space<vmem>>, vector<8x32xf32>
    %c0_1 = arith.constant 0 : index
    %c0_2 = arith.constant 0 : index
    %1 = vector.load %arg3[%c0_1, %c0_2] : memref<32x16xf32, #tpu.memory_space<vmem>>, vector<32x16xf32>
    %cst = arith.constant dense<0.000000e+00> : vector<8x16xf32>
    %2 = tpu.matmul %0, %1, %cst {dimension_numbers = #tpu.dot_dimension_numbers<[1], [0], [0], [1], [0, 0, 1, 1], [], []>} : vector<8x32xf32>, vector<32x16xf32>, vector<8x16xf32> -> vector<8x16xf32>
    %c0_3 = arith.constant 0 : index
    %c0_4 = arith.constant 0 : index
    %3 = vector.load %arg4[%c0_3, %c0_4] : memref<8x16xf32, #tpu.memory_space<vmem>>, vector<8x16xf32>
    tpu.vector_store %arg4[%c0_3, %c0_4], %2 {strides = array<i32>} : memref<8x16xf32, #tpu.memory_space<vmem>>, vector<8x16xf32>,
    %c0_5 = arith.constant 0 : index
    %c0_6 = arith.constant 0 : index
    %c0_7 = arith.constant 0 : index
    %4 = vector.load %arg5[%c0_5, %c0_6, %c0_7] : memref<2x8x16xf32, #tpu.memory_space<vmem>>, vector<1x8x16xf32>
    %5 = vector.shape_cast %4 : vector<1x8x16xf32> to vector<8x16xf32>
    %6 = vector.shape_cast %2 : vector<8x16xf32> to vector<1x8x16xf32>
    tpu.vector_store %arg5[%c0_5, %c0_6, %c0_7], %6 {strides = array<i32>} : memref<2x8x16xf32, #tpu.memory_space<vmem>>, vector<1x8x16xf32>,
    %c1 = arith.constant 1 : index
    %c0_8 = arith.constant 0 : index
    %c0_9 = arith.constant 0 : index
    %7 = vector.load %arg5[%c1, %c0_8, %c0_9] : memref<2x8x16xf32, #tpu.memory_space<vmem>>, vector<1x8x16xf32>
    %8 = vector.shape_cast %7 : vector<1x8x16xf32> to vector<8x16xf32>
    %9 = vector.shape_cast %2 : vector<8x16xf32> to vector<1x8x16xf32>
    tpu.vector_store %arg5[%c1, %c0_8, %c0_9], %9 {strides = array<i32>} : memref<2x8x16xf32, #tpu.memory_space<vmem>>, vector<1x8x16xf32>,
    return
  }
  func.func @transform_0(%arg0: i32, %arg1: i32) -> (i32, i32) {
    %c0_i32 = arith.constant 0 : i32
    %c0_i32_0 = arith.constant 0 : i32
    return %arg0, %c0_i32 : i32, i32
  }
  func.func @transform_1(%arg0: i32, %arg1: i32) -> (i32, i32) {
    %c0_i32 = arith.constant 0 : i32
    %c0_i32_0 = arith.constant 0 : i32
    return %c0_i32, %arg1 : i32, i32
  }
  func.func @transform_2(%arg0: i32, %arg1: i32) -> (i32, i32) {
    %c0_i32 = arith.constant 0 : i32
    return %arg0, %arg1 : i32, i32
  }
  func.func @transform_3(%arg0: i32, %arg1: i32) -> (i32, i32, i32) {
    %c0_i32 = arith.constant 0 : i32
    %c0_i32_0 = arith.constant 0 : i32
    return %c0_i32, %arg0, %arg1 : i32, i32, i32
  }
}

</mosaic_0001>

<llo_original>
// kernel: tpu_custom_call.1
$region0: #{tpu_custom_call.1}
  #allocation0 [shape = 'u32[]', space=smem, size = 0x4, offset = 0x4, fixed_abs, tag = 'smem constant byte address 0x4 - core index']
  #allocation1 [shape = 'u32[72,128]{1,0:T(1,128)}', space=vmem, size = 0x9000, scoped, tag = 'internal scratch']
  %s0 = inlined_call_operand.vmem [shape: f32[8,32], index: 0, kind: input, shape index: {}]
  %s1 = inlined_call_operand.vmem [shape: f32[32,16], index: 1, kind: input, shape index: {}]
  %s2 = inlined_call_operand.hbm [shape: f32[8,16], index: 2, kind: output, shape index: {0}]
  %s3 = inlined_call_operand.hbm [shape: f32[2,8,16], index: 3, kind: output, shape index: {1}]
  %4 = xla_tuple %s2, %s3
  %s5 = sld [smem:[#allocation0]]
  $region26: #{tpu_custom_call.1} parent=0
    _
  %s7 = ssub.s32 1, %s5
  %s8 = scalar_select 0, %s7, %s5
  $region1: #{tpu_custom_call.1} parent=0
    #allocation2 [shape = 'u8[4096]{0}', space=vmem, size = 0x1000, scoped, tag = 'output window, operand 0, single buffered']
    #allocation3 [shape = 's32[1]{0}', space=sflag, size = 0x4, scoped, tag = 'scoped memory for tpu_custom_call.1']
    #allocation4 [shape = 'u8[8192]{0}', space=vmem, size = 0x2000, scoped, tag = 'output window, operand 1, single buffered']
    #allocation5 [shape = 's32[1]{0}', space=sflag, size = 0x4, scoped, tag = 'scoped memory for tpu_custom_call.1']
    %9 = vsyncpa [#allocation3], 0
    %10 = vsyncpa [#allocation5], 0
    // Predicated region
    $region2: #{tpu_custom_call.1} parent=1 // pred_check
      _
    $region3: #{tpu_custom_call.1} parent=1 // pred_check_branch
      %12 = sbr.rel (0) target = $region5
    $region4: #{tpu_custom_call.1} parent=1 // pred_region
      _
    $region5: #{tpu_custom_call.1} parent=1 // pred_fallthru
      _
    // Predicated region
    $region6: #{tpu_custom_call.1} parent=1 // pred_check
      _
    $region7: #{tpu_custom_call.1} parent=1 // pred_check_branch
      %14 = sbr.rel (0) target = $region9
    $region8: #{tpu_custom_call.1} parent=1 // pred_region
      _
    $region9: #{tpu_custom_call.1} parent=1 // pred_fallthru
      _
    %v15 = vld [vmem:[%s0] sm:$0xff]
    %v16 = vld [vmem:[%s1] sm:$0xff]
    %v17 = vld [vmem:[%s1 + $0x8] sm:$0xff]
    %v18 = vld [vmem:[%s1 + $0x10] sm:$0xff]
    %v19 = vld [vmem:[%s1 + $0x18] sm:$0xff]
    %vm20 = vcmask 261120
    %v22 = vsel %vm20, %v15, 0
    %24 = vmatpush.msra.mxu0 0.0
    %25 = vmatpush.msra.mxu0 0.0
    %26 = vmatpush.msra.mxu0 0.0
    %27 = vmatpush.msra.mxu0 0.0
    %28 = vmatpush.msra.mxu0 0.0
    %29 = vmatpush.msra.mxu0 0.0
    %30 = vmatpush.msra.mxu0 0.0
    %31 = vmatpush.msra.mxu0 0.0
    %32 = vmatpush.msra.mxu0 0.0
    %33 = vmatpush.msra.mxu0 0.0
    %34 = vmatpush.msra.mxu0 0.0
    %35 = vmatpush.msra.mxu0 0.0
    %36 = vmatpush.msra.mxu0 %v19
    %37 = vmatpush.msra.mxu0 %v18
    %38 = vmatpush.msra.mxu0 %v17
    %39 = vmatpush.msra.mxu0 %v16
    %40 = vmatmul.f32.gmra.mxu0 %v22
    %v41 = vpop.f32.mrf.mxu0
    %v42 = vadd.f32 0.0, %v41
    %43 = vdwg.mxu0
    %vm44 = vcmask 130048
    %45 = vst.msk [vmem:[#allocation2] sm:$0xff] %vm44, %v42
    %46 = vst.msk [vmem:[#allocation4] sm:$0xff] %vm44, %v42
    %s47 = scalar_lea.vmem [#allocation4], 8
    %48 = vst.msk [vmem:[%s47] sm:$0xff] %vm44, %v42
    // Predicated region
    $region10: #{tpu_custom_call.1} parent=1 // pred_check
      _
    $region11: #{tpu_custom_call.1} parent=1 // pred_check_branch
      %50 = sbr.rel (0) target = $region13
    $region12: #{tpu_custom_call.1} parent=1 // pred_region
      %52 = vsyncadd [#allocation3], 0
      %s54 = sshll.u32 [#allocation2], 4
      %s55 = int_to_ptr.vmem [resolvable:$true] %s54
      %s56 = sshll.u32 %s2, 4
      %s57 = int_to_ptr.hbm [resolvable:$true] %s56
      %59 = dma.vmem_to_hbm [thread:$0]  %s55, 128, %s57, [#allocation3]
    $region13: #{tpu_custom_call.1} parent=1 // pred_fallthru
      _
    // Predicated region
    $region14: #{tpu_custom_call.1} parent=1 // pred_check
      _
    $region15: #{tpu_custom_call.1} parent=1 // pred_check_branch
      %61 = sbr.rel (0) target = $region17
    $region16: #{tpu_custom_call.1} parent=1 // pred_region
      %63 = vsyncadd [#allocation5], 0
      %s64 = sshll.u32 [#allocation4], 4
      %s65 = int_to_ptr.vmem [resolvable:$true] %s64
      %s66 = sshll.u32 %s3, 4
      %s67 = int_to_ptr.hbm [resolvable:$true] %s66
      %72 = dma.vmem_to_hbm [thread:$0]  %s65, 256, %s67, [#allocation5], 128, 128, 8
    $region17: #{tpu_custom_call.1} parent=1 // pred_fallthru
      _
    // Predicated region
    $region18: #{tpu_custom_call.1} parent=1 // pred_check
      _
    $region19: #{tpu_custom_call.1} parent=1 // pred_check_branch
      %74 = sbr.rel (0) target = $region21
    $region20: #{tpu_custom_call.1} parent=1 // pred_region
      %76 = dma.done [#allocation3], 128
    $region21: #{tpu_custom_call.1} parent=1 // pred_fallthru
      _
    // Predicated region
    $region22: #{tpu_custom_call.1} parent=1 // pred_check
      _
    $region23: #{tpu_custom_call.1} parent=1 // pred_check_branch
      %78 = sbr.rel (0) target = $region25
    $region24: #{tpu_custom_call.1} parent=1 // pred_region
      %80 = dma.done [#allocation5], 256
    $region25: #{tpu_custom_call.1} parent=1 // pred_fallthru
      _
    %81 = vsyncpa [#allocation3], 1
    %82 = vsyncpa [#allocation5], 1

</llo_original>
